<compile_context>
chip_gen: v7x
topology: tpu7x:2x2x1
jax: 0.10.0
libtpu: 0.0.40
codegen_flags: <defaults>
</compile_context>

<pallas_src>
import functools

import jax
import jax.numpy as jnp
from jax.experimental import pallas as pl
from jax.experimental.pallas import tpu as pltpu


def _round_up(x, m):
    return ((x + m - 1) // m) * m


def _soft_wcl_kernel(w_ref, s_ref, out_ref, *, q_values, chunk, unroll_q):
    """One channel-tile of the soft weight-cluster loss.

    w_ref  : (C_TILE, 128) f32 repacked weights (zeros in padded lanes/rows)
    s_ref  : (C_TILE, 128) f32 per-lane scale    (zeros in padded lanes/rows)
    out_ref: (8, 128)      f32 lane-dense partial sum for this tile
    """
    q_min = q_values[0]
    q_max = q_values[-1]
    q_num_f = float(len(q_values))
    q_sum_f = float(sum(q_values))

    c_tile = w_ref.shape[0]
    n_chunks = c_tile // chunk

    def chunk_loss(w, s):
        # Exact endpoint max of |w - s*q| over the q range (convex in q).
        m = jnp.maximum(jnp.abs(w - s * q_min), jnp.abs(w - s * q_max))
        zero = jnp.zeros_like(w)

        if unroll_q:
            denom = zero
            num = zero
            for q in q_values:
                d = w - s * q
                e = jnp.exp(jnp.abs(d) - m)
                denom = denom + e
                num = num + d * e
        else:
            def q_body(qi, carry):
                denom, num = carry
                q = q_min + qi.astype(jnp.float32)
                d = w - s * q
                e = jnp.exp(jnp.abs(d) - m)
                return denom + e, num + d * e
            denom, num = jax.lax.fori_loop(0, len(q_values), q_body,
                                           (zero, zero))

        # sum_q d_q = Q*w - s*sum(q)  (exact; no loop-carried accumulator)
        sum_d = q_num_f * w - q_sum_f * s

        # EUP approximate reciprocal + one Newton step (near f32-exact).
        inv = pl.reciprocal(denom, approx=True)
        inv = inv * (2.0 - denom * inv)

        # sum_q d_q * (1 - softmax_q) = sum_d - (sum_q d_q * e_q) / denom
        return sum_d - num * inv

    def row_body(i, acc):
        r0 = pl.multiple_of(i * chunk, chunk)
        w = w_ref[pl.ds(r0, chunk), :]
        s = s_ref[pl.ds(r0, chunk), :]
        loss = chunk_loss(w, s)
        # (chunk, 128) -> (8, 128) lane-dense partial, carried in a vreg.
        return acc + jnp.sum(loss.reshape(chunk // 8, 8, 128), axis=0)

    acc0 = jnp.zeros((8, 128), jnp.float32)
    out_ref[...] = jax.lax.fori_loop(0, n_chunks, row_body, acc0)


def soft_weight_cluster_loss(module_weights, module_scales, *,
                             coefficient, bit, symmetric):
    """module_weights: list of OIHW conv weights (C_out, C_in, kh, kw)
       module_scales : list of per-channel scales (C_out, 1) or scalar scales."""
    thd_pos = 2 ** (bit - 1) - 1
    thd_neg = -thd_pos if symmetric else -(2 ** (bit - 1))
    q_values = tuple(float(q) for q in range(thd_neg, thd_pos + 1))
    q_num = len(q_values)

    # --- host-side fusion: repack every module into uniform 128-lane rows ---
    w_rows, s_rows = [], []
    for w, s in zip(module_weights, module_scales):
        c = w.shape[0]
        w2d = jnp.reshape(w, (c, -1)).astype(jnp.float32)
        k = w2d.shape[1]
        # Handles per-channel (C,1) scales and scalar scales alike.
        s2 = jnp.broadcast_to(
            jnp.reshape(jnp.asarray(s, jnp.float32), (-1, 1)), (c, 1))

        k_rows = -(-k // 128)            # ceil(K / 128)
        k_pad = k_rows * 128
        w_pad = jnp.pad(w2d, ((0, 0), (0, k_pad - k)))
        lane_valid = (jnp.arange(k_pad) < k).astype(jnp.float32)
        s_lanes = s2 * lane_valid[None, :]          # scale=0 in padded lanes

        w_rows.append(w_pad.reshape(c * k_rows, 128))
        s_rows.append(s_lanes.reshape(c * k_rows, 128))

    W = jnp.concatenate(w_rows, axis=0)             # (R_total, 128)
    S = jnp.concatenate(s_rows, axis=0)             # (R_total, 128)
    r_total = W.shape[0]

    # Tile sizing: 2048 rows x 128 lanes f32 = 1 MiB per block; two inputs
    # double-buffered = 4 MiB -> fits default scoped VMEM on v5e/v6e/v7x.
    CHUNK = 64                                       # inner vreg-resident chunk
    TARGET_ROWS = 2048
    c_tile = min(TARGET_ROWS, _round_up(r_total, CHUNK))
    r_padded = _round_up(r_total, c_tile)
    pad_r = r_padded - r_total
    if pad_r:
        # Padded rows have w = s = 0 -> exactly zero loss contribution.
        W = jnp.pad(W, ((0, pad_r), (0, 0)))
        S = jnp.pad(S, ((0, pad_r), (0, 0)))
    num_tiles = r_padded // c_tile

    n_elem = r_padded * 128
    cost = pl.CostEstimate(
        flops=n_elem * (7 * q_num + 12),
        transcendentals=n_elem * q_num,
        bytes_accessed=4 * (W.size + S.size + num_tiles * 8 * 128),
    )

    kern = functools.partial(_soft_wcl_kernel, q_values=q_values,
                             chunk=CHUNK, unroll_q=(q_num <= 32))

    partials = pl.pallas_call(
        kern,
        out_shape=jax.ShapeDtypeStruct((num_tiles * 8, 128), jnp.float32),
        grid=(num_tiles,),
        in_specs=[
            pl.BlockSpec((c_tile, 128), lambda i: (i, 0)),
            pl.BlockSpec((c_tile, 128), lambda i: (i, 0)),
        ],
        out_specs=pl.BlockSpec((8, 128), lambda i: (i, 0)),
        compiler_params=pltpu.CompilerParams(
            dimension_semantics=("parallel",)),
        cost_estimate=cost,
    )(W, S)

    return jnp.sum(partials) * (coefficient / (q_num - 1))


def _reference(module_weights, module_scales, *, coefficient, bit, symmetric):
    """Pure-JAX reference mirroring the PyTorch SoftWeightClusterLoss loop."""
    thd_pos = 2 ** (bit - 1) - 1
    thd_neg = -thd_pos if symmetric else -(2 ** (bit - 1))
    q_range = jnp.arange(thd_neg, thd_pos + 1, dtype=jnp.float32)
    q_num = q_range.shape[0]
    total = jnp.zeros((), jnp.float32)
    for w, s in zip(module_weights, module_scales):
        w2d = jnp.reshape(w, (w.shape[0], -1)).astype(jnp.float32)
        s2 = jnp.reshape(jnp.asarray(s, jnp.float32), (-1, 1))
        centers = s2 * q_range                                  # (C, Q)
        d = w2d[:, :, None] - centers[:, None, :]               # (C, K, Q)
        sm = jax.nn.softmax(jnp.abs(d), axis=2)
        weighted = d * (1.0 - sm) / (q_num - 1)
        total = total + jnp.sum(weighted)
    return total * coefficient


if __name__ == "__main__":
    key = jax.random.PRNGKey(0)
    k1, k2 = jax.random.split(key)

    # Two synthetic quantized conv "modules" (OIHW weights, per-channel scales).
    bit = 4
    symmetric = True
    thd_pos = 2 ** (bit - 1) - 1

    w1 = jax.random.normal(k1, (4, 4, 3, 3), dtype=jnp.float32) * 0.1
    w2 = jax.random.normal(k2, (8, 4, 3, 3), dtype=jnp.float32) * 0.1

    # Deterministic per-channel scale ~ max|w| / thd_pos (typical quantizer init).
    s1 = jnp.max(jnp.abs(w1.reshape(4, -1)), axis=1, keepdims=True) / thd_pos
    s2 = jnp.max(jnp.abs(w2.reshape(8, -1)), axis=1, keepdims=True) / thd_pos

    weights = [w1, w2]
    scales = [s1, s2]
    coefficient = 0.01

    loss = soft_weight_cluster_loss(
        weights, scales, coefficient=coefficient, bit=bit, symmetric=symmetric)
    loss = jax.block_until_ready(loss)

    ref = _reference(
        weights, scales, coefficient=coefficient, bit=bit, symmetric=symmetric)

    assert jnp.allclose(loss, ref, rtol=1e-4, atol=1e-5), (float(loss), float(ref))

    print("KERNEL_OK")
</pallas_src>

<mosaic_0001>
module attributes {stable_mosaic.version = 11 : i64} {
  func.func @_soft_wcl_kernel(%arg0: i32, %arg1: memref<64x128xf32, #tpu.memory_space<vmem>>, %arg2: memref<64x128xf32, #tpu.memory_space<vmem>>, %arg3: memref<8x128xf32, #tpu.memory_space<vmem>>) attributes {dimension_semantics = [#tpu.dimension_semantics<parallel>], iteration_bounds = array<i64: 1>, scalar_prefetch = 0 : i64, scratch_operands = 0 : i64, tpu.core_type = #tpu.core_type<tc>, window_params = [{transform_indices = @transform_0, window_bounds = array<i64: 64, 128>}, {transform_indices = @transform_1, window_bounds = array<i64: 64, 128>}, {transform_indices = @transform_2, window_bounds = array<i64: 8, 128>}]} {
    %cst = arith.constant 0.000000e+00 : f32
    %0 = vector.broadcast %cst : f32 to vector<8x128xf32>
    %c0_i32 = arith.constant 0 : i32
    %c64_i32 = arith.constant 64 : i32
    %1 = arith.muli %c0_i32, %c64_i32 : i32
    %2 = tpu.assume_multiple %1, 64 : i32
    %3 = arith.index_cast %2 : i32 to index
    %c0 = arith.constant 0 : index
    %4 = vector.load %arg1[%3, %c0] : memref<64x128xf32, #tpu.memory_space<vmem>>, vector<64x128xf32>
    %5 = arith.index_cast %2 : i32 to index
    %c0_0 = arith.constant 0 : index
    %6 = vector.load %arg2[%5, %c0_0] : memref<64x128xf32, #tpu.memory_space<vmem>>, vector<64x128xf32>
    %cst_1 = arith.constant -7.000000e+00 : f32
    %7 = vector.broadcast %cst_1 : f32 to vector<64x128xf32>
    %8 = arith.mulf %6, %7 : vector<64x128xf32>
    %9 = arith.subf %4, %8 : vector<64x128xf32>
    %10 = math.absf %9 : vector<64x128xf32>
    %cst_2 = arith.constant 7.000000e+00 : f32
    %11 = vector.broadcast %cst_2 : f32 to vector<64x128xf32>
    %12 = arith.mulf %6, %11 : vector<64x128xf32>
    %13 = arith.subf %4, %12 : vector<64x128xf32>
    %14 = math.absf %13 : vector<64x128xf32>
    %15 = arith.maximumf %10, %14 : vector<64x128xf32>
    %cst_3 = arith.constant 0.000000e+00 : f32
    %16 = vector.broadcast %cst_3 : f32 to vector<64x128xf32>
    %cst_4 = arith.constant -7.000000e+00 : f32
    %17 = vector.broadcast %cst_4 : f32 to vector<64x128xf32>
    %18 = arith.mulf %6, %17 : vector<64x128xf32>
    %19 = arith.subf %4, %18 : vector<64x128xf32>
    %20 = math.absf %19 : vector<64x128xf32>
    %21 = arith.subf %20, %15 : vector<64x128xf32>
    %22 = math.exp %21 : vector<64x128xf32>
    %23 = arith.addf %16, %22 : vector<64x128xf32>
    %24 = arith.mulf %19, %22 : vector<64x128xf32>
    %25 = arith.addf %16, %24 : vector<64x128xf32>
    %cst_5 = arith.constant -6.000000e+00 : f32
    %26 = vector.broadcast %cst_5 : f32 to vector<64x128xf32>
    %27 = arith.mulf %6, %26 : vector<64x128xf32>
    %28 = arith.subf %4, %27 : vector<64x128xf32>
    %29 = math.absf %28 : vector<64x128xf32>
    %30 = arith.subf %29, %15 : vector<64x128xf32>
    %31 = math.exp %30 : vector<64x128xf32>
    %32 = arith.addf %23, %31 : vector<64x128xf32>
    %33 = arith.mulf %28, %31 : vector<64x128xf32>
    %34 = arith.addf %25, %33 : vector<64x128xf32>
    %cst_6 = arith.constant -5.000000e+00 : f32
    %35 = vector.broadcast %cst_6 : f32 to vector<64x128xf32>
    %36 = arith.mulf %6, %35 : vector<64x128xf32>
    %37 = arith.subf %4, %36 : vector<64x128xf32>
    %38 = math.absf %37 : vector<64x128xf32>
    %39 = arith.subf %38, %15 : vector<64x128xf32>
    %40 = math.exp %39 : vector<64x128xf32>
    %41 = arith.addf %32, %40 : vector<64x128xf32>
    %42 = arith.mulf %37, %40 : vector<64x128xf32>
    %43 = arith.addf %34, %42 : vector<64x128xf32>
    %cst_7 = arith.constant -4.000000e+00 : f32
    %44 = vector.broadcast %cst_7 : f32 to vector<64x128xf32>
    %45 = arith.mulf %6, %44 : vector<64x128xf32>
    %46 = arith.subf %4, %45 : vector<64x128xf32>
    %47 = math.absf %46 : vector<64x128xf32>
    %48 = arith.subf %47, %15 : vector<64x128xf32>
    %49 = math.exp %48 : vector<64x128xf32>
    %50 = arith.addf %41, %49 : vector<64x128xf32>
    %51 = arith.mulf %46, %49 : vector<64x128xf32>
    %52 = arith.addf %43, %51 : vector<64x128xf32>
    %cst_8 = arith.constant -3.000000e+00 : f32
    %53 = vector.broadcast %cst_8 : f32 to vector<64x128xf32>
    %54 = arith.mulf %6, %53 : vector<64x128xf32>
    %55 = arith.subf %4, %54 : vector<64x128xf32>
    %56 = math.absf %55 : vector<64x128xf32>
    %57 = arith.subf %56, %15 : vector<64x128xf32>
    %58 = math.exp %57 : vector<64x128xf32>
    %59 = arith.addf %50, %58 : vector<64x128xf32>
    %60 = arith.mulf %55, %58 : vector<64x128xf32>
    %61 = arith.addf %52, %60 : vector<64x128xf32>
    %cst_9 = arith.constant -2.000000e+00 : f32
    %62 = vector.broadcast %cst_9 : f32 to vector<64x128xf32>
    %63 = arith.mulf %6, %62 : vector<64x128xf32>
    %64 = arith.subf %4, %63 : vector<64x128xf32>
    %65 = math.absf %64 : vector<64x128xf32>
    %66 = arith.subf %65, %15 : vector<64x128xf32>
    %67 = math.exp %66 : vector<64x128xf32>
    %68 = arith.addf %59, %67 : vector<64x128xf32>
    %69 = arith.mulf %64, %67 : vector<64x128xf32>
    %70 = arith.addf %61, %69 : vector<64x128xf32>
    %cst_10 = arith.constant -1.000000e+00 : f32
    %71 = vector.broadcast %cst_10 : f32 to vector<64x128xf32>
    %72 = arith.mulf %6, %71 : vector<64x128xf32>
    %73 = arith.subf %4, %72 : vector<64x128xf32>
    %74 = math.absf %73 : vector<64x128xf32>
    %75 = arith.subf %74, %15 : vector<64x128xf32>
    %76 = math.exp %75 : vector<64x128xf32>
    %77 = arith.addf %68, %76 : vector<64x128xf32>
    %78 = arith.mulf %73, %76 : vector<64x128xf32>
    %79 = arith.addf %70, %78 : vector<64x128xf32>
    %cst_11 = arith.constant 0.000000e+00 : f32
    %80 = vector.broadcast %cst_11 : f32 to vector<64x128xf32>
    %81 = arith.mulf %6, %80 : vector<64x128xf32>
    %82 = arith.subf %4, %81 : vector<64x128xf32>
    %83 = math.absf %82 : vector<64x128xf32>
    %84 = arith.subf %83, %15 : vector<64x128xf32>
    %85 = math.exp %84 : vector<64x128xf32>
    %86 = arith.addf %77, %85 : vector<64x128xf32>
    %87 = arith.mulf %82, %85 : vector<64x128xf32>
    %88 = arith.addf %79, %87 : vector<64x128xf32>
    %cst_12 = arith.constant 1.000000e+00 : f32
    %89 = vector.broadcast %cst_12 : f32 to vector<64x128xf32>
    %90 = arith.mulf %6, %89 : vector<64x128xf32>
    %91 = arith.subf %4, %90 : vector<64x128xf32>
    %92 = math.absf %91 : vector<64x128xf32>
    %93 = arith.subf %92, %15 : vector<64x128xf32>
    %94 = math.exp %93 : vector<64x128xf32>
    %95 = arith.addf %86, %94 : vector<64x128xf32>
    %96 = arith.mulf %91, %94 : vector<64x128xf32>
    %97 = arith.addf %88, %96 : vector<64x128xf32>
    %cst_13 = arith.constant 2.000000e+00 : f32
    %98 = vector.broadcast %cst_13 : f32 to vector<64x128xf32>
    %99 = arith.mulf %6, %98 : vector<64x128xf32>
    %100 = arith.subf %4, %99 : vector<64x128xf32>
    %101 = math.absf %100 : vector<64x128xf32>
    %102 = arith.subf %101, %15 : vector<64x128xf32>
    %103 = math.exp %102 : vector<64x128xf32>
    %104 = arith.addf %95, %103 : vector<64x128xf32>
    %105 = arith.mulf %100, %103 : vector<64x128xf32>
    %106 = arith.addf %97, %105 : vector<64x128xf32>
    %cst_14 = arith.constant 3.000000e+00 : f32
    %107 = vector.broadcast %cst_14 : f32 to vector<64x128xf32>
    %108 = arith.mulf %6, %107 : vector<64x128xf32>
    %109 = arith.subf %4, %108 : vector<64x128xf32>
    %110 = math.absf %109 : vector<64x128xf32>
    %111 = arith.subf %110, %15 : vector<64x128xf32>
    %112 = math.exp %111 : vector<64x128xf32>
    %113 = arith.addf %104, %112 : vector<64x128xf32>
    %114 = arith.mulf %109, %112 : vector<64x128xf32>
    %115 = arith.addf %106, %114 : vector<64x128xf32>
    %cst_15 = arith.constant 4.000000e+00 : f32
    %116 = vector.broadcast %cst_15 : f32 to vector<64x128xf32>
    %117 = arith.mulf %6, %116 : vector<64x128xf32>
    %118 = arith.subf %4, %117 : vector<64x128xf32>
    %119 = math.absf %118 : vector<64x128xf32>
    %120 = arith.subf %119, %15 : vector<64x128xf32>
    %121 = math.exp %120 : vector<64x128xf32>
    %122 = arith.addf %113, %121 : vector<64x128xf32>
    %123 = arith.mulf %118, %121 : vector<64x128xf32>
    %124 = arith.addf %115, %123 : vector<64x128xf32>
    %cst_16 = arith.constant 5.000000e+00 : f32
    %125 = vector.broadcast %cst_16 : f32 to vector<64x128xf32>
    %126 = arith.mulf %6, %125 : vector<64x128xf32>
    %127 = arith.subf %4, %126 : vector<64x128xf32>
    %128 = math.absf %127 : vector<64x128xf32>
    %129 = arith.subf %128, %15 : vector<64x128xf32>
    %130 = math.exp %129 : vector<64x128xf32>
    %131 = arith.addf %122, %130 : vector<64x128xf32>
    %132 = arith.mulf %127, %130 : vector<64x128xf32>
    %133 = arith.addf %124, %132 : vector<64x128xf32>
    %cst_17 = arith.constant 6.000000e+00 : f32
    %134 = vector.broadcast %cst_17 : f32 to vector<64x128xf32>
    %135 = arith.mulf %6, %134 : vector<64x128xf32>
    %136 = arith.subf %4, %135 : vector<64x128xf32>
    %137 = math.absf %136 : vector<64x128xf32>
    %138 = arith.subf %137, %15 : vector<64x128xf32>
    %139 = math.exp %138 : vector<64x128xf32>
    %140 = arith.addf %131, %139 : vector<64x128xf32>
    %141 = arith.mulf %136, %139 : vector<64x128xf32>
    %142 = arith.addf %133, %141 : vector<64x128xf32>
    %cst_18 = arith.constant 7.000000e+00 : f32
    %143 = vector.broadcast %cst_18 : f32 to vector<64x128xf32>
    %144 = arith.mulf %6, %143 : vector<64x128xf32>
    %145 = arith.subf %4, %144 : vector<64x128xf32>
    %146 = math.absf %145 : vector<64x128xf32>
    %147 = arith.subf %146, %15 : vector<64x128xf32>
    %148 = math.exp %147 : vector<64x128xf32>
    %149 = arith.addf %140, %148 : vector<64x128xf32>
    %150 = arith.mulf %145, %148 : vector<64x128xf32>
    %151 = arith.addf %142, %150 : vector<64x128xf32>
    %cst_19 = arith.constant 1.500000e+01 : f32
    %152 = vector.broadcast %cst_19 : f32 to vector<64x128xf32>
    %153 = arith.mulf %152, %4 : vector<64x128xf32>
    %cst_20 = arith.constant 0.000000e+00 : f32
    %154 = vector.broadcast %cst_20 : f32 to vector<64x128xf32>
    %155 = arith.mulf %154, %6 : vector<64x128xf32>
    %156 = arith.subf %153, %155 : vector<64x128xf32>
    %157 = tpu.reciprocal %149 {approx = true} : vector<64x128xf32> -> vector<64x128xf32>
    %158 = arith.mulf %149, %157 : vector<64x128xf32>
    %cst_21 = arith.constant 2.000000e+00 : f32
    %159 = vector.broadcast %cst_21 : f32 to vector<64x128xf32>
    %160 = arith.subf %159, %158 : vector<64x128xf32>
    %161 = arith.mulf %157, %160 : vector<64x128xf32>
    %162 = arith.mulf %151, %161 : vector<64x128xf32>
    %163 = arith.subf %156, %162 : vector<64x128xf32>
    %164 = vector.shape_cast %163 : vector<64x128xf32> to vector<8x8x128xf32>
    %cst_22 = arith.constant dense<0.000000e+00> : vector<8x128xf32>
    %165 = vector.multi_reduction <add>, %164, %cst_22 [0] : vector<8x8x128xf32> to vector<8x128xf32>
    %166 = arith.addf %0, %165 : vector<8x128xf32>
    %c1_i32 = arith.constant 1 : i32
    %c0_23 = arith.constant 0 : index
    %c0_24 = arith.constant 0 : index
    %167 = vector.load %arg3[%c0_23, %c0_24] : memref<8x128xf32, #tpu.memory_space<vmem>>, vector<8x128xf32>
    tpu.vector_store %arg3[%c0_23, %c0_24], %166 {strides = array<i32>} : memref<8x128xf32, #tpu.memory_space<vmem>>, vector<8x128xf32>,
    return
  }
  func.func @transform_0(%arg0: i32) -> (i32, i32) {
    %c0_i32 = arith.constant 0 : i32
    %c0_i32_0 = arith.constant 0 : i32
    return %arg0, %c0_i32 : i32, i32
  }
  func.func @transform_1(%arg0: i32) -> (i32, i32) {
    %c0_i32 = arith.constant 0 : i32
    %c0_i32_0 = arith.constant 0 : i32
    return %arg0, %c0_i32 : i32, i32
  }
  func.func @transform_2(%arg0: i32) -> (i32, i32) {
    %c0_i32 = arith.constant 0 : i32
    %c0_i32_0 = arith.constant 0 : i32
    return %arg0, %c0_i32 : i32, i32
  }
}

</mosaic_0001>

<llo_original>
// kernel: tpu_custom_call.1
$region0: #{tpu_custom_call.1}
  #allocation0 [shape = 'u32[]', space=smem, size = 0x4, offset = 0x4, fixed_abs, tag = 'smem constant byte address 0x4 - core index']
  #allocation1 [shape = 'u32[144,128]{1,0:T(1,128)}', space=vmem, size = 0x12000, scoped, tag = 'internal scratch']
  %s0 = inlined_call_operand.hbm [shape: f32[64,128], index: 0, kind: input, shape index: {}]
  %s1 = inlined_call_operand.hbm [shape: f32[64,128], index: 1, kind: input, shape index: {}]
  %s2 = inlined_call_operand.hbm [shape: f32[8,128], index: 2, kind: output, shape index: {}]
  %s3 = sld [smem:[#allocation0]]
  $region26: #{tpu_custom_call.1} parent=0
    _
  %s5 = ssub.s32 1, %s3
  %s6 = scalar_select 0, %s5, %s3
  $region1: #{tpu_custom_call.1} parent=0
    #allocation2 [shape = 'u8[32768]{0}', space=vmem, size = 0x8000, scoped, tag = 'input window, operand 0, single buffered']
    #allocation3 [shape = 's32[1]{0}', space=sflag, size = 0x4, scoped, tag = 'scoped memory for tpu_custom_call.1']
    #allocation4 [shape = 's32[1]{0}', space=sflag, size = 0x4, scoped, tag = 'scoped memory for tpu_custom_call.1']
    #allocation5 [shape = 'u8[32768]{0}', space=vmem, size = 0x8000, scoped, tag = 'input window, operand 1, single buffered']
    #allocation6 [shape = 's32[1]{0}', space=sflag, size = 0x4, scoped, tag = 'scoped memory for tpu_custom_call.1']
    #allocation7 [shape = 'u8[4096]{0}', space=vmem, size = 0x1000, scoped, tag = 'output window, operand 0, single buffered']
    %7 = vsyncpa [#allocation3], 0
    %8 = vsyncpa [#allocation6], 0
    %9 = vsyncpa [#allocation4], 0
    // Predicated region
    $region2: #{tpu_custom_call.1} parent=1 // pred_check
      _
    $region3: #{tpu_custom_call.1} parent=1 // pred_check_branch
      %11 = sbr.rel (0) target = $region5
    $region4: #{tpu_custom_call.1} parent=1 // pred_region
      %s13 = ssub.s32 1024, 1024
      %14 = vsyncadd [#allocation3], %s13
      %s15 = sshll.u32 [#allocation2], 4
      %s16 = int_to_ptr.vmem [resolvable:$true] %s15
      %21 = dma.hbm_to_vmem [thread:$0]  %s0, 1024, %s16, [#allocation3], 128, 128, 8
    $region5: #{tpu_custom_call.1} parent=1 // pred_fallthru
      _
    // Predicated region
    $region6: #{tpu_custom_call.1} parent=1 // pred_check
      _
    $region7: #{tpu_custom_call.1} parent=1 // pred_check_branch
      %23 = sbr.rel (0) target = $region9
    $region8: #{tpu_custom_call.1} parent=1 // pred_region
      %s25 = ssub.s32 1024, 1024
      %26 = vsyncadd [#allocation6], %s25
      %s27 = sshll.u32 [#allocation5], 4
      %s28 = int_to_ptr.vmem [resolvable:$true] %s27
      %33 = dma.hbm_to_vmem [thread:$0]  %s1, 1024, %s28, [#allocation6], 128, 128, 8
    $region9: #{tpu_custom_call.1} parent=1 // pred_fallthru
      _
    // Predicated region
    $region10: #{tpu_custom_call.1} parent=1 // pred_check
      _
    $region11: #{tpu_custom_call.1} parent=1 // pred_check_branch
      %35 = sbr.rel (0) target = $region13
    $region12: #{tpu_custom_call.1} parent=1 // pred_region
      %36 = dma.done [#allocation3], 1024
    $region13: #{tpu_custom_call.1} parent=1 // pred_fallthru
      _
    // Predicated region
    $region14: #{tpu_custom_call.1} parent=1 // pred_check
      _
    $region15: #{tpu_custom_call.1} parent=1 // pred_check_branch
      %38 = sbr.rel (0) target = $region17
    $region16: #{tpu_custom_call.1} parent=1 // pred_region
      %39 = dma.done [#allocation6], 1024
    $region17: #{tpu_custom_call.1} parent=1 // pred_fallthru
      _
    %v40 = vld [vmem:[#allocation2] sm:$0xff]
    %v41 = vld [vmem:[#allocation2 + $0x8] sm:$0xff]
    %v42 = vld [vmem:[#allocation2 + $0x10] sm:$0xff]
    %v43 = vld [vmem:[#allocation2 + $0x18] sm:$0xff]
    %v44 = vld [vmem:[#allocation2 + $0x20] sm:$0xff]
    %v45 = vld [vmem:[#allocation2 + $0x28] sm:$0xff]
    %v46 = vld [vmem:[#allocation2 + $0x30] sm:$0xff]
    %v47 = vld [vmem:[#allocation2 + $0x38] sm:$0xff]
    %v48 = vld [vmem:[#allocation5] sm:$0xff]
    %v49 = vld [vmem:[#allocation5 + $0x8] sm:$0xff]
    %v50 = vld [vmem:[#allocation5 + $0x10] sm:$0xff]
    %v51 = vld [vmem:[#allocation5 + $0x18] sm:$0xff]
    %v52 = vld [vmem:[#allocation5 + $0x20] sm:$0xff]
    %v53 = vld [vmem:[#allocation5 + $0x28] sm:$0xff]
    %v54 = vld [vmem:[#allocation5 + $0x30] sm:$0xff]
    %v55 = vld [vmem:[#allocation5 + $0x38] sm:$0xff]
    %v56 = vmul.f32 %v48, -7.0
    %v57 = vmul.f32 %v49, -7.0
    %v58 = vmul.f32 %v50, -7.0
    %v59 = vmul.f32 %v51, -7.0
    %v60 = vmul.f32 %v52, -7.0
    %v61 = vmul.f32 %v53, -7.0
    %v62 = vmul.f32 %v54, -7.0
    %v63 = vmul.f32 %v55, -7.0
    %v64 = vsub.f32 %v40, %v56
    %v65 = vsub.f32 %v41, %v57
    %v66 = vsub.f32 %v42, %v58
    %v67 = vsub.f32 %v43, %v59
    %v68 = vsub.f32 %v44, %v60
    %v69 = vsub.f32 %v45, %v61
    %v70 = vsub.f32 %v46, %v62
    %v71 = vsub.f32 %v47, %v63
    %v72 = vand.u32 2147483647, %v64
    %v73 = vand.u32 2147483647, %v65
    %v74 = vand.u32 2147483647, %v66
    %v75 = vand.u32 2147483647, %v67
    %v76 = vand.u32 2147483647, %v68
    %v77 = vand.u32 2147483647, %v69
    %v78 = vand.u32 2147483647, %v70
    %v79 = vand.u32 2147483647, %v71
    %v80 = vmul.f32 %v48, 7.0
    %v81 = vmul.f32 %v49, 7.0
    %v82 = vmul.f32 %v50, 7.0
    %v83 = vmul.f32 %v51, 7.0
    %v84 = vmul.f32 %v52, 7.0
    %v85 = vmul.f32 %v53, 7.0
    %v86 = vmul.f32 %v54, 7.0
    %v87 = vmul.f32 %v55, 7.0
    %v88 = vsub.f32 %v40, %v80
    %v89 = vsub.f32 %v41, %v81
    %v90 = vsub.f32 %v42, %v82
    %v91 = vsub.f32 %v43, %v83
    %v92 = vsub.f32 %v44, %v84
    %v93 = vsub.f32 %v45, %v85
    %v94 = vsub.f32 %v46, %v86
    %v95 = vsub.f32 %v47, %v87
    %v96 = vand.u32 2147483647, %v88
    %v97 = vand.u32 2147483647, %v89
    %v98 = vand.u32 2147483647, %v90
    %v99 = vand.u32 2147483647, %v91
    %v100 = vand.u32 2147483647, %v92
    %v101 = vand.u32 2147483647, %v93
    %v102 = vand.u32 2147483647, %v94
    %v103 = vand.u32 2147483647, %v95
    %v104 = vmax.f32 %v72, %v96
    %v105 = vmax.f32 %v73, %v97
    %v106 = vmax.f32 %v74, %v98
    %v107 = vmax.f32 %v75, %v99
    %v108 = vmax.f32 %v76, %v100
    %v109 = vmax.f32 %v77, %v101
    %v110 = vmax.f32 %v78, %v102
    %v111 = vmax.f32 %v79, %v103
    %v112 = vsub.f32 %v72, %v104
    %v113 = vsub.f32 %v73, %v105
    %v114 = vsub.f32 %v74, %v106
    %v115 = vsub.f32 %v75, %v107
    %v116 = vsub.f32 %v76, %v108
    %v117 = vsub.f32 %v77, %v109
    %v118 = vsub.f32 %v78, %v110
    %v119 = vsub.f32 %v79, %v111
    %v120 = vmul.f32 %v112, 1.442695
    %v121 = vpow.pop %v120
    %v122 = vmul.f32 %v113, 1.442695
    %v123 = vpow.pop %v122
    %v124 = vmul.f32 %v114, 1.442695
    %v125 = vpow.pop %v124
    %v126 = vmul.f32 %v115, 1.442695
    %v127 = vpow.pop %v126
    %v128 = vmul.f32 %v116, 1.442695
    %v129 = vpow.pop %v128
    %v130 = vmul.f32 %v117, 1.442695
    %v131 = vpow.pop %v130
    %v132 = vmul.f32 %v118, 1.442695
    %v133 = vpow.pop %v132
    %v134 = vmul.f32 %v119, 1.442695
    %v135 = vpow.pop %v134
    %v136 = vadd.f32 %v121, 0.0
    %v137 = vadd.f32 %v123, 0.0
    %v138 = vadd.f32 %v125, 0.0
    %v139 = vadd.f32 %v127, 0.0
    %v140 = vadd.f32 %v129, 0.0
    %v141 = vadd.f32 %v131, 0.0
    %v142 = vadd.f32 %v133, 0.0
    %v143 = vadd.f32 %v135, 0.0
    %v144 = vmul.f32 %v64, %v121
    %v145 = vmul.f32 %v65, %v123
    %v146 = vmul.f32 %v66, %v125
    %v147 = vmul.f32 %v67, %v127
    %v148 = vmul.f32 %v68, %v129
    %v149 = vmul.f32 %v69, %v131
    %v150 = vmul.f32 %v70, %v133
    %v151 = vmul.f32 %v71, %v135
    %v152 = vadd.f32 %v144, 0.0
    %v153 = vadd.f32 %v145, 0.0
    %v154 = vadd.f32 %v146, 0.0
    %v155 = vadd.f32 %v147, 0.0
    %v156 = vadd.f32 %v148, 0.0
    %v157 = vadd.f32 %v149, 0.0
    %v158 = vadd.f32 %v150, 0.0
    %v159 = vadd.f32 %v151, 0.0
    %v160 = vmul.f32 %v48, -6.0
    %v161 = vmul.f32 %v49, -6.0
    %v162 = vmul.f32 %v50, -6.0
    %v163 = vmul.f32 %v51, -6.0
    %v164 = vmul.f32 %v52, -6.0
    %v165 = vmul.f32 %v53, -6.0
    %v166 = vmul.f32 %v54, -6.0
    %v167 = vmul.f32 %v55, -6.0
    %v168 = vsub.f32 %v40, %v160
    %v169 = vsub.f32 %v41, %v161
    %v170 = vsub.f32 %v42, %v162
    %v171 = vsub.f32 %v43, %v163
    %v172 = vsub.f32 %v44, %v164
    %v173 = vsub.f32 %v45, %v165
    %v174 = vsub.f32 %v46, %v166
    %v175 = vsub.f32 %v47, %v167
    %v176 = vand.u32 2147483647, %v168
    %v177 = vand.u32 2147483647, %v169
    %v178 = vand.u32 2147483647, %v170
    %v179 = vand.u32 2147483647, %v171
    %v180 = vand.u32 2147483647, %v172
    %v181 = vand.u32 2147483647, %v173
    %v182 = vand.u32 2147483647, %v174
    %v183 = vand.u32 2147483647, %v175
    %v184 = vsub.f32 %v176, %v104
    %v185 = vsub.f32 %v177, %v105
    %v186 = vsub.f32 %v178, %v106
    %v187 = vsub.f32 %v179, %v107
    %v188 = vsub.f32 %v180, %v108
    %v189 = vsub.f32 %v181, %v109
    %v190 = vsub.f32 %v182, %v110
    %v191 = vsub.f32 %v183, %v111
    %v192 = vmul.f32 %v184, 1.442695
    %v193 = vpow.pop %v192
    %v194 = vmul.f32 %v185, 1.442695
    %v195 = vpow.pop %v194
    %v196 = vmul.f32 %v186, 1.442695
    %v197 = vpow.pop %v196
    %v198 = vmul.f32 %v187, 1.442695
    %v199 = vpow.pop %v198
    %v200 = vmul.f32 %v188, 1.442695
    %v201 = vpow.pop %v200
    %v202 = vmul.f32 %v189, 1.442695
    %v203 = vpow.pop %v202
    %v204 = vmul.f32 %v190, 1.442695
    %v205 = vpow.pop %v204
    %v206 = vmul.f32 %v191, 1.442695
    %v207 = vpow.pop %v206
    %v208 = vadd.f32 %v136, %v193
    %v209 = vadd.f32 %v137, %v195
    %v210 = vadd.f32 %v138, %v197
    %v211 = vadd.f32 %v139, %v199
    %v212 = vadd.f32 %v140, %v201
    %v213 = vadd.f32 %v141, %v203
    %v214 = vadd.f32 %v142, %v205
    %v215 = vadd.f32 %v143, %v207
    %v216 = vmul.f32 %v168, %v193
    %v217 = vmul.f32 %v169, %v195
    %v218 = vmul.f32 %v170, %v197
    %v219 = vmul.f32 %v171, %v199
    %v220 = vmul.f32 %v172, %v201
    %v221 = vmul.f32 %v173, %v203
    %v222 = vmul.f32 %v174, %v205
    %v223 = vmul.f32 %v175, %v207
    %v224 = vadd.f32 %v152, %v216
    %v225 = vadd.f32 %v153, %v217
    %v226 = vadd.f32 %v154, %v218
    %v227 = vadd.f32 %v155, %v219
    %v228 = vadd.f32 %v156, %v220
    %v229 = vadd.f32 %v157, %v221
    %v230 = vadd.f32 %v158, %v222
    %v231 = vadd.f32 %v159, %v223
    %v232 = vmul.f32 %v48, -5.0
    %v233 = vmul.f32 %v49, -5.0
    %v234 = vmul.f32 %v50, -5.0
    %v235 = vmul.f32 %v51, -5.0
    %v236 = vmul.f32 %v52, -5.0
    %v237 = vmul.f32 %v53, -5.0
    %v238 = vmul.f32 %v54, -5.0
    %v239 = vmul.f32 %v55, -5.0
    %v240 = vsub.f32 %v40, %v232
    %v241 = vsub.f32 %v41, %v233
    %v242 = vsub.f32 %v42, %v234
    %v243 = vsub.f32 %v43, %v235
    %v244 = vsub.f32 %v44, %v236
    %v245 = vsub.f32 %v45, %v237
    %v246 = vsub.f32 %v46, %v238
    %v247 = vsub.f32 %v47, %v239
    %v248 = vand.u32 2147483647, %v240
    %v249 = vand.u32 2147483647, %v241
    %v250 = vand.u32 2147483647, %v242
    %v251 = vand.u32 2147483647, %v243
    %v252 = vand.u32 2147483647, %v244
    %v253 = vand.u32 2147483647, %v245
    %v254 = vand.u32 2147483647, %v246
    %v255 = vand.u32 2147483647, %v247
    %v256 = vsub.f32 %v248, %v104
    %v257 = vsub.f32 %v249, %v105
    %v258 = vsub.f32 %v250, %v106
    %v259 = vsub.f32 %v251, %v107
    %v260 = vsub.f32 %v252, %v108
    %v261 = vsub.f32 %v253, %v109
    %v262 = vsub.f32 %v254, %v110
    %v263 = vsub.f32 %v255, %v111
    %v264 = vmul.f32 %v256, 1.442695
    %v265 = vpow.pop %v264
    %v266 = vmul.f32 %v257, 1.442695
    %v267 = vpow.pop %v266
    %v268 = vmul.f32 %v258, 1.442695
    %v269 = vpow.pop %v268
    %v270 = vmul.f32 %v259, 1.442695
    %v271 = vpow.pop %v270
    %v272 = vmul.f32 %v260, 1.442695
    %v273 = vpow.pop %v272
    %v274 = vmul.f32 %v261, 1.442695
    %v275 = vpow.pop %v274
    %v276 = vmul.f32 %v262, 1.442695
    %v277 = vpow.pop %v276
    %v278 = vmul.f32 %v263, 1.442695
    %v279 = vpow.pop %v278
    %v280 = vadd.f32 %v208, %v265
    %v281 = vadd.f32 %v209, %v267
    %v282 = vadd.f32 %v210, %v269
    %v283 = vadd.f32 %v211, %v271
    %v284 = vadd.f32 %v212, %v273
    %v285 = vadd.f32 %v213, %v275
    %v286 = vadd.f32 %v214, %v277
    %v287 = vadd.f32 %v215, %v279
    %v288 = vmul.f32 %v240, %v265
    %v289 = vmul.f32 %v241, %v267
    %v290 = vmul.f32 %v242, %v269
    %v291 = vmul.f32 %v243, %v271
    %v292 = vmul.f32 %v244, %v273
    %v293 = vmul.f32 %v245, %v275
    %v294 = vmul.f32 %v246, %v277
    %v295 = vmul.f32 %v247, %v279
    %v296 = vadd.f32 %v224, %v288
    %v297 = vadd.f32 %v225, %v289
    %v298 = vadd.f32 %v226, %v290
    %v299 = vadd.f32 %v227, %v291
    %v300 = vadd.f32 %v228, %v292
    %v301 = vadd.f32 %v229, %v293
    %v302 = vadd.f32 %v230, %v294
    %v303 = vadd.f32 %v231, %v295
    %v304 = vmul.f32 %v48, -4.0
    %v305 = vmul.f32 %v49, -4.0
    %v306 = vmul.f32 %v50, -4.0
    %v307 = vmul.f32 %v51, -4.0
    %v308 = vmul.f32 %v52, -4.0
    %v309 = vmul.f32 %v53, -4.0
    %v310 = vmul.f32 %v54, -4.0
    %v311 = vmul.f32 %v55, -4.0
    %v312 = vsub.f32 %v40, %v304
    %v313 = vsub.f32 %v41, %v305
    %v314 = vsub.f32 %v42, %v306
    %v315 = vsub.f32 %v43, %v307
    %v316 = vsub.f32 %v44, %v308
    %v317 = vsub.f32 %v45, %v309
    %v318 = vsub.f32 %v46, %v310
    %v319 = vsub.f32 %v47, %v311
    %v320 = vand.u32 2147483647, %v312
    %v321 = vand.u32 2147483647, %v313
    %v322 = vand.u32 2147483647, %v314
    %v323 = vand.u32 2147483647, %v315
    %v324 = vand.u32 2147483647, %v316
    %v325 = vand.u32 2147483647, %v317
    %v326 = vand.u32 2147483647, %v318
    %v327 = vand.u32 2147483647, %v319
    %v328 = vsub.f32 %v320, %v104
    %v329 = vsub.f32 %v321, %v105
    %v330 = vsub.f32 %v322, %v106
    %v331 = vsub.f32 %v323, %v107
    %v332 = vsub.f32 %v324, %v108
    %v333 = vsub.f32 %v325, %v109
    %v334 = vsub.f32 %v326, %v110
    %v335 = vsub.f32 %v327, %v111
    %v336 = vmul.f32 %v328, 1.442695
    %v337 = vpow.pop %v336
    %v338 = vmul.f32 %v329, 1.442695
    %v339 = vpow.pop %v338
    %v340 = vmul.f32 %v330, 1.442695
    %v341 = vpow.pop %v340
    %v342 = vmul.f32 %v331, 1.442695
    %v343 = vpow.pop %v342
    %v344 = vmul.f32 %v332, 1.442695
    %v345 = vpow.pop %v344
    %v346 = vmul.f32 %v333, 1.442695
    %v347 = vpow.pop %v346
    %v348 = vmul.f32 %v334, 1.442695
    %v349 = vpow.pop %v348
    %v350 = vmul.f32 %v335, 1.442695
    %v351 = vpow.pop %v350
    %v352 = vadd.f32 %v280, %v337
    %v353 = vadd.f32 %v281, %v339
    %v354 = vadd.f32 %v282, %v341
    %v355 = vadd.f32 %v283, %v343
    %v356 = vadd.f32 %v284, %v345
    %v357 = vadd.f32 %v285, %v347
    %v358 = vadd.f32 %v286, %v349
    %v359 = vadd.f32 %v287, %v351
    %v360 = vmul.f32 %v312, %v337
    %v361 = vmul.f32 %v313, %v339
    %v362 = vmul.f32 %v314, %v341
    %v363 = vmul.f32 %v315, %v343
    %v364 = vmul.f32 %v316, %v345
    %v365 = vmul.f32 %v317, %v347
    %v366 = vmul.f32 %v318, %v349
    %v367 = vmul.f32 %v319, %v351
    %v368 = vadd.f32 %v296, %v360
    %v369 = vadd.f32 %v297, %v361
    %v370 = vadd.f32 %v298, %v362
    %v371 = vadd.f32 %v299, %v363
    %v372 = vadd.f32 %v300, %v364
    %v373 = vadd.f32 %v301, %v365
    %v374 = vadd.f32 %v302, %v366
    %v375 = vadd.f32 %v303, %v367
    %v376 = vmul.f32 %v48, -3.0
    %v377 = vmul.f32 %v49, -3.0
    %v378 = vmul.f32 %v50, -3.0
    %v379 = vmul.f32 %v51, -3.0
    %v380 = vmul.f32 %v52, -3.0
    %v381 = vmul.f32 %v53, -3.0
    %v382 = vmul.f32 %v54, -3.0
    %v383 = vmul.f32 %v55, -3.0
    %v384 = vsub.f32 %v40, %v376
    %v385 = vsub.f32 %v41, %v377
    %v386 = vsub.f32 %v42, %v378
    %v387 = vsub.f32 %v43, %v379
    %v388 = vsub.f32 %v44, %v380
    %v389 = vsub.f32 %v45, %v381
    %v390 = vsub.f32 %v46, %v382
    %v391 = vsub.f32 %v47, %v383
    %v392 = vand.u32 2147483647, %v384
    %v393 = vand.u32 2147483647, %v385
    %v394 = vand.u32 2147483647, %v386
    %v395 = vand.u32 2147483647, %v387
    %v396 = vand.u32 2147483647, %v388
    %v397 = vand.u32 2147483647, %v389
    %v398 = vand.u32 2147483647, %v390
    %v399 = vand.u32 2147483647, %v391
    %v400 = vsub.f32 %v392, %v104
    %v401 = vsub.f32 %v393, %v105
    %v402 = vsub.f32 %v394, %v106
    %v403 = vsub.f32 %v395, %v107
    %v404 = vsub.f32 %v396, %v108
    %v405 = vsub.f32 %v397, %v109
    %v406 = vsub.f32 %v398, %v110
    %v407 = vsub.f32 %v399, %v111
    %v408 = vmul.f32 %v400, 1.442695
    %v409 = vpow.pop %v408
    %v410 = vmul.f32 %v401, 1.442695
    %v411 = vpow.pop %v410
    %v412 = vmul.f32 %v402, 1.442695
    %v413 = vpow.pop %v412
    %v414 = vmul.f32 %v403, 1.442695
    %v415 = vpow.pop %v414
    %v416 = vmul.f32 %v404, 1.442695
    %v417 = vpow.pop %v416
    %v418 = vmul.f32 %v405, 1.442695
    %v419 = vpow.pop %v418
    %v420 = vmul.f32 %v406, 1.442695
    %v421 = vpow.pop %v420
    %v422 = vmul.f32 %v407, 1.442695
    %v423 = vpow.pop %v422
    %v424 = vadd.f32 %v352, %v409
    %v425 = vadd.f32 %v353, %v411
    %v426 = vadd.f32 %v354, %v413
    %v427 = vadd.f32 %v355, %v415
    %v428 = vadd.f32 %v356, %v417
    %v429 = vadd.f32 %v357, %v419
    %v430 = vadd.f32 %v358, %v421
    %v431 = vadd.f32 %v359, %v423
    %v432 = vmul.f32 %v384, %v409
    %v433 = vmul.f32 %v385, %v411
    %v434 = vmul.f32 %v386, %v413
    %v435 = vmul.f32 %v387, %v415
    %v436 = vmul.f32 %v388, %v417
    %v437 = vmul.f32 %v389, %v419
    %v438 = vmul.f32 %v390, %v421
    %v439 = vmul.f32 %v391, %v423
    %v440 = vadd.f32 %v368, %v432
    %v441 = vadd.f32 %v369, %v433
    %v442 = vadd.f32 %v370, %v434
    %v443 = vadd.f32 %v371, %v435
    %v444 = vadd.f32 %v372, %v436
    %v445 = vadd.f32 %v373, %v437
    %v446 = vadd.f32 %v374, %v438
    %v447 = vadd.f32 %v375, %v439
    %v448 = vmul.f32 %v48, -2.0
    %v449 = vmul.f32 %v49, -2.0
    %v450 = vmul.f32 %v50, -2.0
    %v451 = vmul.f32 %v51, -2.0
    %v452 = vmul.f32 %v52, -2.0
    %v453 = vmul.f32 %v53, -2.0
    %v454 = vmul.f32 %v54, -2.0
    %v455 = vmul.f32 %v55, -2.0
    %v456 = vsub.f32 %v40, %v448
    %v457 = vsub.f32 %v41, %v449
    %v458 = vsub.f32 %v42, %v450
    %v459 = vsub.f32 %v43, %v451
    %v460 = vsub.f32 %v44, %v452
    %v461 = vsub.f32 %v45, %v453
    %v462 = vsub.f32 %v46, %v454
    %v463 = vsub.f32 %v47, %v455
    %v464 = vand.u32 2147483647, %v456
    %v465 = vand.u32 2147483647, %v457
    %v466 = vand.u32 2147483647, %v458
    %v467 = vand.u32 2147483647, %v459
    %v468 = vand.u32 2147483647, %v460
    %v469 = vand.u32 2147483647, %v461
    %v470 = vand.u32 2147483647, %v462
    %v471 = vand.u32 2147483647, %v463
    %v472 = vsub.f32 %v464, %v104
    %v473 = vsub.f32 %v465, %v105
    %v474 = vsub.f32 %v466, %v106
    %v475 = vsub.f32 %v467, %v107
    %v476 = vsub.f32 %v468, %v108
    %v477 = vsub.f32 %v469, %v109
    %v478 = vsub.f32 %v470, %v110
    %v479 = vsub.f32 %v471, %v111
    %v480 = vmul.f32 %v472, 1.442695
    %v481 = vpow.pop %v480
    %v482 = vmul.f32 %v473, 1.442695
    %v483 = vpow.pop %v482
    %v484 = vmul.f32 %v474, 1.442695
    %v485 = vpow.pop %v484
    %v486 = vmul.f32 %v475, 1.442695
    %v487 = vpow.pop %v486
    %v488 = vmul.f32 %v476, 1.442695
    %v489 = vpow.pop %v488
    %v490 = vmul.f32 %v477, 1.442695
    %v491 = vpow.pop %v490
    %v492 = vmul.f32 %v478, 1.442695
    %v493 = vpow.pop %v492
    %v494 = vmul.f32 %v479, 1.442695
    %v495 = vpow.pop %v494
    %v496 = vadd.f32 %v424, %v481
    %v497 = vadd.f32 %v425, %v483
    %v498 = vadd.f32 %v426, %v485
    %v499 = vadd.f32 %v427, %v487
    %v500 = vadd.f32 %v428, %v489
    %v501 = vadd.f32 %v429, %v491
    %v502 = vadd.f32 %v430, %v493
    %v503 = vadd.f32 %v431, %v495
    %v504 = vmul.f32 %v456, %v481
    %v505 = vmul.f32 %v457, %v483
    %v506 = vmul.f32 %v458, %v485
    %v507 = vmul.f32 %v459, %v487
    %v508 = vmul.f32 %v460, %v489
    %v509 = vmul.f32 %v461, %v491
    %v510 = vmul.f32 %v462, %v493
    %v511 = vmul.f32 %v463, %v495
    %v512 = vadd.f32 %v440, %v504
    %v513 = vadd.f32 %v441, %v505
    %v514 = vadd.f32 %v442, %v506
    %v515 = vadd.f32 %v443, %v507
    %v516 = vadd.f32 %v444, %v508
    %v517 = vadd.f32 %v445, %v509
    %v518 = vadd.f32 %v446, %v510
    %v519 = vadd.f32 %v447, %v511
    %v520 = vmul.f32 %v48, -1.0
    %v521 = vmul.f32 %v49, -1.0
    %v522 = vmul.f32 %v50, -1.0
    %v523 = vmul.f32 %v51, -1.0
    %v524 = vmul.f32 %v52, -1.0
    %v525 = vmul.f32 %v53, -1.0
    %v526 = vmul.f32 %v54, -1.0
    %v527 = vmul.f32 %v55, -1.0
    %v528 = vsub.f32 %v40, %v520
    %v529 = vsub.f32 %v41, %v521
    %v530 = vsub.f32 %v42, %v522
    %v531 = vsub.f32 %v43, %v523
    %v532 = vsub.f32 %v44, %v524
    %v533 = vsub.f32 %v45, %v525
    %v534 = vsub.f32 %v46, %v526
    %v535 = vsub.f32 %v47, %v527
    %v536 = vand.u32 2147483647, %v528
    %v537 = vand.u32 2147483647, %v529
    %v538 = vand.u32 2147483647, %v530
    %v539 = vand.u32 2147483647, %v531
    %v540 = vand.u32 2147483647, %v532
    %v541 = vand.u32 2147483647, %v533
    %v542 = vand.u32 2147483647, %v534
    %v543 = vand.u32 2147483647, %v535
    %v544 = vsub.f32 %v536, %v104
    %v545 = vsub.f32 %v537, %v105
    %v546 = vsub.f32 %v538, %v106
    %v547 = vsub.f32 %v539, %v107
    %v548 = vsub.f32 %v540, %v108
    %v549 = vsub.f32 %v541, %v109
    %v550 = vsub.f32 %v542, %v110
    %v551 = vsub.f32 %v543, %v111
    %v552 = vmul.f32 %v544, 1.442695
    %v553 = vpow.pop %v552
    %v554 = vmul.f32 %v545, 1.442695
    %v555 = vpow.pop %v554
    %v556 = vmul.f32 %v546, 1.442695
    %v557 = vpow.pop %v556
    %v558 = vmul.f32 %v547, 1.442695
    %v559 = vpow.pop %v558
    %v560 = vmul.f32 %v548, 1.442695
    %v561 = vpow.pop %v560
    %v562 = vmul.f32 %v549, 1.442695
    %v563 = vpow.pop %v562
    %v564 = vmul.f32 %v550, 1.442695
    %v565 = vpow.pop %v564
    %v566 = vmul.f32 %v551, 1.442695
    %v567 = vpow.pop %v566
    %v568 = vadd.f32 %v496, %v553
    %v569 = vadd.f32 %v497, %v555
    %v570 = vadd.f32 %v498, %v557
    %v571 = vadd.f32 %v499, %v559
    %v572 = vadd.f32 %v500, %v561
    %v573 = vadd.f32 %v501, %v563
    %v574 = vadd.f32 %v502, %v565
    %v575 = vadd.f32 %v503, %v567
    %v576 = vmul.f32 %v528, %v553
    %v577 = vmul.f32 %v529, %v555
    %v578 = vmul.f32 %v530, %v557
    %v579 = vmul.f32 %v531, %v559
    %v580 = vmul.f32 %v532, %v561
    %v581 = vmul.f32 %v533, %v563
    %v582 = vmul.f32 %v534, %v565
    %v583 = vmul.f32 %v535, %v567
    %v584 = vadd.f32 %v512, %v576
    %v585 = vadd.f32 %v513, %v577
    %v586 = vadd.f32 %v514, %v578
    %v587 = vadd.f32 %v515, %v579
    %v588 = vadd.f32 %v516, %v580
    %v589 = vadd.f32 %v517, %v581
    %v590 = vadd.f32 %v518, %v582
    %v591 = vadd.f32 %v519, %v583
    %v592 = vmul.f32 %v48, 0.0
    %v593 = vmul.f32 %v49, 0.0
    %v594 = vmul.f32 %v50, 0.0
    %v595 = vmul.f32 %v51, 0.0
    %v596 = vmul.f32 %v52, 0.0
    %v597 = vmul.f32 %v53, 0.0
    %v598 = vmul.f32 %v54, 0.0
    %v599 = vmul.f32 %v55, 0.0
    %v600 = vsub.f32 %v40, %v592
    %v601 = vsub.f32 %v41, %v593
    %v602 = vsub.f32 %v42, %v594
    %v603 = vsub.f32 %v43, %v595
    %v604 = vsub.f32 %v44, %v596
    %v605 = vsub.f32 %v45, %v597
    %v606 = vsub.f32 %v46, %v598
    %v607 = vsub.f32 %v47, %v599
    %v608 = vand.u32 2147483647, %v600
    %v609 = vand.u32 2147483647, %v601
    %v610 = vand.u32 2147483647, %v602
    %v611 = vand.u32 2147483647, %v603
    %v612 = vand.u32 2147483647, %v604
    %v613 = vand.u32 2147483647, %v605
    %v614 = vand.u32 2147483647, %v606
    %v615 = vand.u32 2147483647, %v607
    %v616 = vsub.f32 %v608, %v104
    %v617 = vsub.f32 %v609, %v105
    %v618 = vsub.f32 %v610, %v106
    %v619 = vsub.f32 %v611, %v107
    %v620 = vsub.f32 %v612, %v108
    %v621 = vsub.f32 %v613, %v109
    %v622 = vsub.f32 %v614, %v110
    %v623 = vsub.f32 %v615, %v111
    %v624 = vmul.f32 %v616, 1.442695
    %v625 = vpow.pop %v624
    %v626 = vmul.f32 %v617, 1.442695
    %v627 = vpow.pop %v626
    %v628 = vmul.f32 %v618, 1.442695
    %v629 = vpow.pop %v628
    %v630 = vmul.f32 %v619, 1.442695
    %v631 = vpow.pop %v630
    %v632 = vmul.f32 %v620, 1.442695
    %v633 = vpow.pop %v632
    %v634 = vmul.f32 %v621, 1.442695
    %v635 = vpow.pop %v634
    %v636 = vmul.f32 %v622, 1.442695
    %v637 = vpow.pop %v636
    %v638 = vmul.f32 %v623, 1.442695
    %v639 = vpow.pop %v638
    %v640 = vadd.f32 %v568, %v625
    %v641 = vadd.f32 %v569, %v627
    %v642 = vadd.f32 %v570, %v629
    %v643 = vadd.f32 %v571, %v631
    %v644 = vadd.f32 %v572, %v633
    %v645 = vadd.f32 %v573, %v635
    %v646 = vadd.f32 %v574, %v637
    %v647 = vadd.f32 %v575, %v639
    %v648 = vmul.f32 %v600, %v625
    %v649 = vmul.f32 %v601, %v627
    %v650 = vmul.f32 %v602, %v629
    %v651 = vmul.f32 %v603, %v631
    %v652 = vmul.f32 %v604, %v633
    %v653 = vmul.f32 %v605, %v635
    %v654 = vmul.f32 %v606, %v637
    %v655 = vmul.f32 %v607, %v639
    %v656 = vadd.f32 %v584, %v648
    %v657 = vadd.f32 %v585, %v649
    %v658 = vadd.f32 %v586, %v650
    %v659 = vadd.f32 %v587, %v651
    %v660 = vadd.f32 %v588, %v652
    %v661 = vadd.f32 %v589, %v653
    %v662 = vadd.f32 %v590, %v654
    %v663 = vadd.f32 %v591, %v655
    %v664 = vsub.f32 %v40, %v48
    %v665 = vsub.f32 %v41, %v49
    %v666 = vsub.f32 %v42, %v50
    %v667 = vsub.f32 %v43, %v51
    %v668 = vsub.f32 %v44, %v52
    %v669 = vsub.f32 %v45, %v53
    %v670 = vsub.f32 %v46, %v54
    %v671 = vsub.f32 %v47, %v55
    %v672 = vand.u32 2147483647, %v664
    %v673 = vand.u32 2147483647, %v665
    %v674 = vand.u32 2147483647, %v666
    %v675 = vand.u32 2147483647, %v667
    %v676 = vand.u32 2147483647, %v668
    %v677 = vand.u32 2147483647, %v669
    %v678 = vand.u32 2147483647, %v670
    %v679 = vand.u32 2147483647, %v671
    %v680 = vsub.f32 %v672, %v104
    %v681 = vsub.f32 %v673, %v105
    %v682 = vsub.f32 %v674, %v106
    %v683 = vsub.f32 %v675, %v107
    %v684 = vsub.f32 %v676, %v108
    %v685 = vsub.f32 %v677, %v109
    %v686 = vsub.f32 %v678, %v110
    %v687 = vsub.f32 %v679, %v111
    %v688 = vmul.f32 %v680, 1.442695
    %v689 = vpow.pop %v688
    %v690 = vmul.f32 %v681, 1.442695
    %v691 = vpow.pop %v690
    %v692 = vmul.f32 %v682, 1.442695
    %v693 = vpow.pop %v692
    %v694 = vmul.f32 %v683, 1.442695
    %v695 = vpow.pop %v694
    %v696 = vmul.f32 %v684, 1.442695
    %v697 = vpow.pop %v696
    %v698 = vmul.f32 %v685, 1.442695
    %v699 = vpow.pop %v698
    %v700 = vmul.f32 %v686, 1.442695
    %v701 = vpow.pop %v700
    %v702 = vmul.f32 %v687, 1.442695
    %v703 = vpow.pop %v702
    %v704 = vadd.f32 %v640, %v689
    %v705 = vadd.f32 %v641, %v691
    %v706 = vadd.f32 %v642, %v693
    %v707 = vadd.f32 %v643, %v695
    %v708 = vadd.f32 %v644, %v697
    %v709 = vadd.f32 %v645, %v699
    %v710 = vadd.f32 %v646, %v701
    %v711 = vadd.f32 %v647, %v703
    %v712 = vmul.f32 %v664, %v689
    %v713 = vmul.f32 %v665, %v691
    %v714 = vmul.f32 %v666, %v693
    %v715 = vmul.f32 %v667, %v695
    %v716 = vmul.f32 %v668, %v697
    %v717 = vmul.f32 %v669, %v699
    %v718 = vmul.f32 %v670, %v701
    %v719 = vmul.f32 %v671, %v703
    %v720 = vadd.f32 %v656, %v712
    %v721 = vadd.f32 %v657, %v713
    %v722 = vadd.f32 %v658, %v714
    %v723 = vadd.f32 %v659, %v715
    %v724 = vadd.f32 %v660, %v716
    %v725 = vadd.f32 %v661, %v717
    %v726 = vadd.f32 %v662, %v718
    %v727 = vadd.f32 %v663, %v719
    %v728 = vmul.f32 %v48, 2.0
    %v729 = vmul.f32 %v49, 2.0
    %v730 = vmul.f32 %v50, 2.0
    %v731 = vmul.f32 %v51, 2.0
    %v732 = vmul.f32 %v52, 2.0
    %v733 = vmul.f32 %v53, 2.0
    %v734 = vmul.f32 %v54, 2.0
    %v735 = vmul.f32 %v55, 2.0
    %v736 = vsub.f32 %v40, %v728
    %v737 = vsub.f32 %v41, %v729
    %v738 = vsub.f32 %v42, %v730
    %v739 = vsub.f32 %v43, %v731
    %v740 = vsub.f32 %v44, %v732
    %v741 = vsub.f32 %v45, %v733
    %v742 = vsub.f32 %v46, %v734
    %v743 = vsub.f32 %v47, %v735
    %v744 = vand.u32 2147483647, %v736
    %v745 = vand.u32 2147483647, %v737
    %v746 = vand.u32 2147483647, %v738
    %v747 = vand.u32 2147483647, %v739
    %v748 = vand.u32 2147483647, %v740
    %v749 = vand.u32 2147483647, %v741
    %v750 = vand.u32 2147483647, %v742
    %v751 = vand.u32 2147483647, %v743
    %v752 = vsub.f32 %v744, %v104
    %v753 = vsub.f32 %v745, %v105
    %v754 = vsub.f32 %v746, %v106
    %v755 = vsub.f32 %v747, %v107
    %v756 = vsub.f32 %v748, %v108
    %v757 = vsub.f32 %v749, %v109
    %v758 = vsub.f32 %v750, %v110
    %v759 = vsub.f32 %v751, %v111
    %v760 = vmul.f32 %v752, 1.442695
    %v761 = vpow.pop %v760
    %v762 = vmul.f32 %v753, 1.442695
    %v763 = vpow.pop %v762
    %v764 = vmul.f32 %v754, 1.442695
    %v765 = vpow.pop %v764
    %v766 = vmul.f32 %v755, 1.442695
    %v767 = vpow.pop %v766
    %v768 = vmul.f32 %v756, 1.442695
    %v769 = vpow.pop %v768
    %v770 = vmul.f32 %v757, 1.442695
    %v771 = vpow.pop %v770
    %v772 = vmul.f32 %v758, 1.442695
    %v773 = vpow.pop %v772
    %v774 = vmul.f32 %v759, 1.442695
    %v775 = vpow.pop %v774
    %v776 = vadd.f32 %v704, %v761
    %v777 = vadd.f32 %v705, %v763
    %v778 = vadd.f32 %v706, %v765
    %v779 = vadd.f32 %v707, %v767
    %v780 = vadd.f32 %v708, %v769
    %v781 = vadd.f32 %v709, %v771
    %v782 = vadd.f32 %v710, %v773
    %v783 = vadd.f32 %v711, %v775
    %v784 = vmul.f32 %v736, %v761
    %v785 = vmul.f32 %v737, %v763
    %v786 = vmul.f32 %v738, %v765
    %v787 = vmul.f32 %v739, %v767
    %v788 = vmul.f32 %v740, %v769
    %v789 = vmul.f32 %v741, %v771
    %v790 = vmul.f32 %v742, %v773
    %v791 = vmul.f32 %v743, %v775
    %v792 = vadd.f32 %v720, %v784
    %v793 = vadd.f32 %v721, %v785
    %v794 = vadd.f32 %v722, %v786
    %v795 = vadd.f32 %v723, %v787
    %v796 = vadd.f32 %v724, %v788
    %v797 = vadd.f32 %v725, %v789
    %v798 = vadd.f32 %v726, %v790
    %v799 = vadd.f32 %v727, %v791
    %v800 = vmul.f32 %v48, 3.0
    %v801 = vmul.f32 %v49, 3.0
    %v802 = vmul.f32 %v50, 3.0
    %v803 = vmul.f32 %v51, 3.0
    %v804 = vmul.f32 %v52, 3.0
    %v805 = vmul.f32 %v53, 3.0
    %v806 = vmul.f32 %v54, 3.0
    %v807 = vmul.f32 %v55, 3.0
    %v808 = vsub.f32 %v40, %v800
    %v809 = vsub.f32 %v41, %v801
    %v810 = vsub.f32 %v42, %v802
    %v811 = vsub.f32 %v43, %v803
    %v812 = vsub.f32 %v44, %v804
    %v813 = vsub.f32 %v45, %v805
    %v814 = vsub.f32 %v46, %v806
    %v815 = vsub.f32 %v47, %v807
    %v816 = vand.u32 2147483647, %v808
    %v817 = vand.u32 2147483647, %v809
    %v818 = vand.u32 2147483647, %v810
    %v819 = vand.u32 2147483647, %v811
    %v820 = vand.u32 2147483647, %v812
    %v821 = vand.u32 2147483647, %v813
    %v822 = vand.u32 2147483647, %v814
    %v823 = vand.u32 2147483647, %v815
    %v824 = vsub.f32 %v816, %v104
    %v825 = vsub.f32 %v817, %v105
    %v826 = vsub.f32 %v818, %v106
    %v827 = vsub.f32 %v819, %v107
    %v828 = vsub.f32 %v820, %v108
    %v829 = vsub.f32 %v821, %v109
    %v830 = vsub.f32 %v822, %v110
    %v831 = vsub.f32 %v823, %v111
    %v832 = vmul.f32 %v824, 1.442695
    %v833 = vpow.pop %v832
    %v834 = vmul.f32 %v825, 1.442695
    %v835 = vpow.pop %v834
    %v836 = vmul.f32 %v826, 1.442695
    %v837 = vpow.pop %v836
    %v838 = vmul.f32 %v827, 1.442695
    %v839 = vpow.pop %v838
    %v840 = vmul.f32 %v828, 1.442695
    %v841 = vpow.pop %v840
    %v842 = vmul.f32 %v829, 1.442695
    %v843 = vpow.pop %v842
    %v844 = vmul.f32 %v830, 1.442695
    %v845 = vpow.pop %v844
    %v846 = vmul.f32 %v831, 1.442695
    %v847 = vpow.pop %v846
    %v848 = vadd.f32 %v776, %v833
    %v849 = vadd.f32 %v777, %v835
    %v850 = vadd.f32 %v778, %v837
    %v851 = vadd.f32 %v779, %v839
    %v852 = vadd.f32 %v780, %v841
    %v853 = vadd.f32 %v781, %v843
    %v854 = vadd.f32 %v782, %v845
    %v855 = vadd.f32 %v783, %v847
    %v856 = vmul.f32 %v808, %v833
    %v857 = vmul.f32 %v809, %v835
    %v858 = vmul.f32 %v810, %v837
    %v859 = vmul.f32 %v811, %v839
    %v860 = vmul.f32 %v812, %v841
    %v861 = vmul.f32 %v813, %v843
    %v862 = vmul.f32 %v814, %v845
    %v863 = vmul.f32 %v815, %v847
    %v864 = vadd.f32 %v792, %v856
    %v865 = vadd.f32 %v793, %v857
    %v866 = vadd.f32 %v794, %v858
    %v867 = vadd.f32 %v795, %v859
    %v868 = vadd.f32 %v796, %v860
    %v869 = vadd.f32 %v797, %v861
    %v870 = vadd.f32 %v798, %v862
    %v871 = vadd.f32 %v799, %v863
    %v872 = vmul.f32 %v48, 4.0
    %v873 = vmul.f32 %v49, 4.0
    %v874 = vmul.f32 %v50, 4.0
    %v875 = vmul.f32 %v51, 4.0
    %v876 = vmul.f32 %v52, 4.0
    %v877 = vmul.f32 %v53, 4.0
    %v878 = vmul.f32 %v54, 4.0
    %v879 = vmul.f32 %v55, 4.0
    %v880 = vsub.f32 %v40, %v872
    %v881 = vsub.f32 %v41, %v873
    %v882 = vsub.f32 %v42, %v874
    %v883 = vsub.f32 %v43, %v875
    %v884 = vsub.f32 %v44, %v876
    %v885 = vsub.f32 %v45, %v877
    %v886 = vsub.f32 %v46, %v878
    %v887 = vsub.f32 %v47, %v879
    %v888 = vand.u32 2147483647, %v880
    %v889 = vand.u32 2147483647, %v881
    %v890 = vand.u32 2147483647, %v882
    %v891 = vand.u32 2147483647, %v883
    %v892 = vand.u32 2147483647, %v884
    %v893 = vand.u32 2147483647, %v885
    %v894 = vand.u32 2147483647, %v886
    %v895 = vand.u32 2147483647, %v887
    %v896 = vsub.f32 %v888, %v104
    %v897 = vsub.f32 %v889, %v105
    %v898 = vsub.f32 %v890, %v106
    %v899 = vsub.f32 %v891, %v107
    %v900 = vsub.f32 %v892, %v108
    %v901 = vsub.f32 %v893, %v109
    %v902 = vsub.f32 %v894, %v110
    %v903 = vsub.f32 %v895, %v111
    %v904 = vmul.f32 %v896, 1.442695
    %v905 = vpow.pop %v904
    %v906 = vmul.f32 %v897, 1.442695
    %v907 = vpow.pop %v906
    %v908 = vmul.f32 %v898, 1.442695
    %v909 = vpow.pop %v908
    %v910 = vmul.f32 %v899, 1.442695
    %v911 = vpow.pop %v910
    %v912 = vmul.f32 %v900, 1.442695
    %v913 = vpow.pop %v912
    %v914 = vmul.f32 %v901, 1.442695
    %v915 = vpow.pop %v914
    %v916 = vmul.f32 %v902, 1.442695
    %v917 = vpow.pop %v916
    %v918 = vmul.f32 %v903, 1.442695
    %v919 = vpow.pop %v918
    %v920 = vadd.f32 %v848, %v905
    %v921 = vadd.f32 %v849, %v907
    %v922 = vadd.f32 %v850, %v909
    %v923 = vadd.f32 %v851, %v911
    %v924 = vadd.f32 %v852, %v913
    %v925 = vadd.f32 %v853, %v915
    %v926 = vadd.f32 %v854, %v917
    %v927 = vadd.f32 %v855, %v919
    %v928 = vmul.f32 %v880, %v905
    %v929 = vmul.f32 %v881, %v907
    %v930 = vmul.f32 %v882, %v909
    %v931 = vmul.f32 %v883, %v911
    %v932 = vmul.f32 %v884, %v913
    %v933 = vmul.f32 %v885, %v915
    %v934 = vmul.f32 %v886, %v917
    %v935 = vmul.f32 %v887, %v919
    %v936 = vadd.f32 %v864, %v928
    %v937 = vadd.f32 %v865, %v929
    %v938 = vadd.f32 %v866, %v930
    %v939 = vadd.f32 %v867, %v931
    %v940 = vadd.f32 %v868, %v932
    %v941 = vadd.f32 %v869, %v933
    %v942 = vadd.f32 %v870, %v934
    %v943 = vadd.f32 %v871, %v935
    %v944 = vmul.f32 %v48, 5.0
    %v945 = vmul.f32 %v49, 5.0
    %v946 = vmul.f32 %v50, 5.0
    %v947 = vmul.f32 %v51, 5.0
    %v948 = vmul.f32 %v52, 5.0
    %v949 = vmul.f32 %v53, 5.0
    %v950 = vmul.f32 %v54, 5.0
    %v951 = vmul.f32 %v55, 5.0
    %v952 = vsub.f32 %v40, %v944
    %v953 = vsub.f32 %v41, %v945
    %v954 = vsub.f32 %v42, %v946
    %v955 = vsub.f32 %v43, %v947
    %v956 = vsub.f32 %v44, %v948
    %v957 = vsub.f32 %v45, %v949
    %v958 = vsub.f32 %v46, %v950
    %v959 = vsub.f32 %v47, %v951
    %v960 = vand.u32 2147483647, %v952
    %v961 = vand.u32 2147483647, %v953
    %v962 = vand.u32 2147483647, %v954
    %v963 = vand.u32 2147483647, %v955
    %v964 = vand.u32 2147483647, %v956
    %v965 = vand.u32 2147483647, %v957
    %v966 = vand.u32 2147483647, %v958
    %v967 = vand.u32 2147483647, %v959
    %v968 = vsub.f32 %v960, %v104
    %v969 = vsub.f32 %v961, %v105
    %v970 = vsub.f32 %v962, %v106
    %v971 = vsub.f32 %v963, %v107
    %v972 = vsub.f32 %v964, %v108
    %v973 = vsub.f32 %v965, %v109
    %v974 = vsub.f32 %v966, %v110
    %v975 = vsub.f32 %v967, %v111
    %v976 = vmul.f32 %v968, 1.442695
    %v977 = vpow.pop %v976
    %v978 = vmul.f32 %v969, 1.442695
    %v979 = vpow.pop %v978
    %v980 = vmul.f32 %v970, 1.442695
    %v981 = vpow.pop %v980
    %v982 = vmul.f32 %v971, 1.442695
    %v983 = vpow.pop %v982
    %v984 = vmul.f32 %v972, 1.442695
    %v985 = vpow.pop %v984
    %v986 = vmul.f32 %v973, 1.442695
    %v987 = vpow.pop %v986
    %v988 = vmul.f32 %v974, 1.442695
    %v989 = vpow.pop %v988
    %v990 = vmul.f32 %v975, 1.442695
    %v991 = vpow.pop %v990
    %v992 = vadd.f32 %v920, %v977
    %v993 = vadd.f32 %v921, %v979
    %v994 = vadd.f32 %v922, %v981
    %v995 = vadd.f32 %v923, %v983
    %v996 = vadd.f32 %v924, %v985
    %v997 = vadd.f32 %v925, %v987
    %v998 = vadd.f32 %v926, %v989
    %v999 = vadd.f32 %v927, %v991
    %v1000 = vmul.f32 %v952, %v977
    %v1001 = vmul.f32 %v953, %v979
    %v1002 = vmul.f32 %v954, %v981
    %v1003 = vmul.f32 %v955, %v983
    %v1004 = vmul.f32 %v956, %v985
    %v1005 = vmul.f32 %v957, %v987
    %v1006 = vmul.f32 %v958, %v989
    %v1007 = vmul.f32 %v959, %v991
    %v1008 = vadd.f32 %v936, %v1000
    %v1009 = vadd.f32 %v937, %v1001
    %v1010 = vadd.f32 %v938, %v1002
    %v1011 = vadd.f32 %v939, %v1003
    %v1012 = vadd.f32 %v940, %v1004
    %v1013 = vadd.f32 %v941, %v1005
    %v1014 = vadd.f32 %v942, %v1006
    %v1015 = vadd.f32 %v943, %v1007
    %v1016 = vmul.f32 %v48, 6.0
    %v1017 = vmul.f32 %v49, 6.0
    %v1018 = vmul.f32 %v50, 6.0
    %v1019 = vmul.f32 %v51, 6.0
    %v1020 = vmul.f32 %v52, 6.0
    %v1021 = vmul.f32 %v53, 6.0
    %v1022 = vmul.f32 %v54, 6.0
    %v1023 = vmul.f32 %v55, 6.0
    %v1024 = vsub.f32 %v40, %v1016
    %v1025 = vsub.f32 %v41, %v1017
    %v1026 = vsub.f32 %v42, %v1018
    %v1027 = vsub.f32 %v43, %v1019
    %v1028 = vsub.f32 %v44, %v1020
    %v1029 = vsub.f32 %v45, %v1021
    %v1030 = vsub.f32 %v46, %v1022
    %v1031 = vsub.f32 %v47, %v1023
    %v1032 = vand.u32 2147483647, %v1024
    %v1033 = vand.u32 2147483647, %v1025
    %v1034 = vand.u32 2147483647, %v1026
    %v1035 = vand.u32 2147483647, %v1027
    %v1036 = vand.u32 2147483647, %v1028
    %v1037 = vand.u32 2147483647, %v1029
    %v1038 = vand.u32 2147483647, %v1030
    %v1039 = vand.u32 2147483647, %v1031
    %v1040 = vsub.f32 %v1032, %v104
    %v1041 = vsub.f32 %v1033, %v105
    %v1042 = vsub.f32 %v1034, %v106
    %v1043 = vsub.f32 %v1035, %v107
    %v1044 = vsub.f32 %v1036, %v108
    %v1045 = vsub.f32 %v1037, %v109
    %v1046 = vsub.f32 %v1038, %v110
    %v1047 = vsub.f32 %v1039, %v111
    %v1048 = vmul.f32 %v1040, 1.442695
    %v1049 = vpow.pop %v1048
    %v1050 = vmul.f32 %v1041, 1.442695
    %v1051 = vpow.pop %v1050
    %v1052 = vmul.f32 %v1042, 1.442695
    %v1053 = vpow.pop %v1052
    %v1054 = vmul.f32 %v1043, 1.442695
    %v1055 = vpow.pop %v1054
    %v1056 = vmul.f32 %v1044, 1.442695
    %v1057 = vpow.pop %v1056
    %v1058 = vmul.f32 %v1045, 1.442695
    %v1059 = vpow.pop %v1058
    %v1060 = vmul.f32 %v1046, 1.442695
    %v1061 = vpow.pop %v1060
    %v1062 = vmul.f32 %v1047, 1.442695
    %v1063 = vpow.pop %v1062
    %v1064 = vadd.f32 %v992, %v1049
    %v1065 = vadd.f32 %v993, %v1051
    %v1066 = vadd.f32 %v994, %v1053
    %v1067 = vadd.f32 %v995, %v1055
    %v1068 = vadd.f32 %v996, %v1057
    %v1069 = vadd.f32 %v997, %v1059
    %v1070 = vadd.f32 %v998, %v1061
    %v1071 = vadd.f32 %v999, %v1063
    %v1072 = vmul.f32 %v1024, %v1049
    %v1073 = vmul.f32 %v1025, %v1051
    %v1074 = vmul.f32 %v1026, %v1053
    %v1075 = vmul.f32 %v1027, %v1055
    %v1076 = vmul.f32 %v1028, %v1057
    %v1077 = vmul.f32 %v1029, %v1059
    %v1078 = vmul.f32 %v1030, %v1061
    %v1079 = vmul.f32 %v1031, %v1063
    %v1080 = vadd.f32 %v1008, %v1072
    %v1081 = vadd.f32 %v1009, %v1073
    %v1082 = vadd.f32 %v1010, %v1074
    %v1083 = vadd.f32 %v1011, %v1075
    %v1084 = vadd.f32 %v1012, %v1076
    %v1085 = vadd.f32 %v1013, %v1077
    %v1086 = vadd.f32 %v1014, %v1078
    %v1087 = vadd.f32 %v1015, %v1079
    %v1088 = vsub.f32 %v96, %v104
    %v1089 = vsub.f32 %v97, %v105
    %v1090 = vsub.f32 %v98, %v106
    %v1091 = vsub.f32 %v99, %v107
    %v1092 = vsub.f32 %v100, %v108
    %v1093 = vsub.f32 %v101, %v109
    %v1094 = vsub.f32 %v102, %v110
    %v1095 = vsub.f32 %v103, %v111
    %v1096 = vmul.f32 %v1088, 1.442695
    %v1097 = vpow.pop %v1096
    %v1098 = vmul.f32 %v1089, 1.442695
    %v1099 = vpow.pop %v1098
    %v1100 = vmul.f32 %v1090, 1.442695
    %v1101 = vpow.pop %v1100
    %v1102 = vmul.f32 %v1091, 1.442695
    %v1103 = vpow.pop %v1102
    %v1104 = vmul.f32 %v1092, 1.442695
    %v1105 = vpow.pop %v1104
    %v1106 = vmul.f32 %v1093, 1.442695
    %v1107 = vpow.pop %v1106
    %v1108 = vmul.f32 %v1094, 1.442695
    %v1109 = vpow.pop %v1108
    %v1110 = vmul.f32 %v1095, 1.442695
    %v1111 = vpow.pop %v1110
    %v1112 = vadd.f32 %v1064, %v1097
    %v1113 = vadd.f32 %v1065, %v1099
    %v1114 = vadd.f32 %v1066, %v1101
    %v1115 = vadd.f32 %v1067, %v1103
    %v1116 = vadd.f32 %v1068, %v1105
    %v1117 = vadd.f32 %v1069, %v1107
    %v1118 = vadd.f32 %v1070, %v1109
    %v1119 = vadd.f32 %v1071, %v1111
    %v1120 = vmul.f32 %v88, %v1097
    %v1121 = vmul.f32 %v89, %v1099
    %v1122 = vmul.f32 %v90, %v1101
    %v1123 = vmul.f32 %v91, %v1103
    %v1124 = vmul.f32 %v92, %v1105
    %v1125 = vmul.f32 %v93, %v1107
    %v1126 = vmul.f32 %v94, %v1109
    %v1127 = vmul.f32 %v95, %v1111
    %v1128 = vadd.f32 %v1080, %v1120
    %v1129 = vadd.f32 %v1081, %v1121
    %v1130 = vadd.f32 %v1082, %v1122
    %v1131 = vadd.f32 %v1083, %v1123
    %v1132 = vadd.f32 %v1084, %v1124
    %v1133 = vadd.f32 %v1085, %v1125
    %v1134 = vadd.f32 %v1086, %v1126
    %v1135 = vadd.f32 %v1087, %v1127
    %v1136 = vmul.f32 %v40, 15.0
    %v1137 = vmul.f32 %v41, 15.0
    %v1138 = vmul.f32 %v42, 15.0
    %v1139 = vmul.f32 %v43, 15.0
    %v1140 = vmul.f32 %v44, 15.0
    %v1141 = vmul.f32 %v45, 15.0
    %v1142 = vmul.f32 %v46, 15.0
    %v1143 = vmul.f32 %v47, 15.0
    %v1144 = vsub.f32 %v1136, %v592
    %v1145 = vsub.f32 %v1137, %v593
    %v1146 = vsub.f32 %v1138, %v594
    %v1147 = vsub.f32 %v1139, %v595
    %v1148 = vsub.f32 %v1140, %v596
    %v1149 = vsub.f32 %v1141, %v597
    %v1150 = vsub.f32 %v1142, %v598
    %v1151 = vsub.f32 %v1143, %v599
    %v1152 = vrcp.pop %v1112
    %v1153 = vrcp.pop %v1113
    %v1154 = vrcp.pop %v1114
    %v1155 = vrcp.pop %v1115
    %v1156 = vrcp.pop %v1116
    %v1157 = vrcp.pop %v1117
    %v1158 = vrcp.pop %v1118
    %v1159 = vrcp.pop %v1119
    %v1160 = vmul.f32 %v1112, %v1152
    %v1161 = vmul.f32 %v1113, %v1153
    %v1162 = vmul.f32 %v1114, %v1154
    %v1163 = vmul.f32 %v1115, %v1155
    %v1164 = vmul.f32 %v1116, %v1156
    %v1165 = vmul.f32 %v1117, %v1157
    %v1166 = vmul.f32 %v1118, %v1158
    %v1167 = vmul.f32 %v1119, %v1159
    %v1168 = vsub.f32 2.0, %v1160
    %v1169 = vsub.f32 2.0, %v1161
    %v1170 = vsub.f32 2.0, %v1162
    %v1171 = vsub.f32 2.0, %v1163
    %v1172 = vsub.f32 2.0, %v1164
    %v1173 = vsub.f32 2.0, %v1165
    %v1174 = vsub.f32 2.0, %v1166
    %v1175 = vsub.f32 2.0, %v1167
    %v1176 = vmul.f32 %v1152, %v1168
    %v1177 = vmul.f32 %v1153, %v1169
    %v1178 = vmul.f32 %v1154, %v1170
    %v1179 = vmul.f32 %v1155, %v1171
    %v1180 = vmul.f32 %v1156, %v1172
    %v1181 = vmul.f32 %v1157, %v1173
    %v1182 = vmul.f32 %v1158, %v1174
    %v1183 = vmul.f32 %v1159, %v1175
    %v1184 = vmul.f32 %v1128, %v1176
    %v1185 = vmul.f32 %v1129, %v1177
    %v1186 = vmul.f32 %v1130, %v1178
    %v1187 = vmul.f32 %v1131, %v1179
    %v1188 = vmul.f32 %v1132, %v1180
    %v1189 = vmul.f32 %v1133, %v1181
    %v1190 = vmul.f32 %v1134, %v1182
    %v1191 = vmul.f32 %v1135, %v1183
    %v1192 = vsub.f32 %v1144, %v1184
    %v1193 = vsub.f32 %v1145, %v1185
    %v1194 = vsub.f32 %v1146, %v1186
    %v1195 = vsub.f32 %v1147, %v1187
    %v1196 = vsub.f32 %v1148, %v1188
    %v1197 = vsub.f32 %v1149, %v1189
    %v1198 = vsub.f32 %v1150, %v1190
    %v1199 = vsub.f32 %v1151, %v1191
    %v1200 = vadd.f32 %v1192, %v1193
    %v1201 = vadd.f32 %v1200, %v1194
    %v1202 = vadd.f32 %v1201, %v1195
    %v1203 = vadd.f32 %v1202, %v1196
    %v1204 = vadd.f32 %v1203, %v1197
    %v1205 = vadd.f32 %v1204, %v1198
    %v1206 = vadd.f32 %v1205, %v1199
    %v1207 = vadd.f32 %v1206, 0.0
    %1208 = vst [vmem:[#allocation7] sm:$0xff] %v1207
    // Predicated region
    $region18: #{tpu_custom_call.1} parent=1 // pred_check
      _
    $region19: #{tpu_custom_call.1} parent=1 // pred_check_branch
      %1210 = sbr.rel (0) target = $region21
    $region20: #{tpu_custom_call.1} parent=1 // pred_region
      %s1212 = ssub.s32 128, 128
      %1213 = vsyncadd [#allocation4], %s1212
      %s1215 = sshll.u32 [#allocation7], 4
      %s1216 = int_to_ptr.vmem [resolvable:$true] %s1215
      %1218 = dma.vmem_to_hbm [thread:$0]  %s1216, 128, %s2, [#allocation4]
    $region21: #{tpu_custom_call.1} parent=1 // pred_fallthru
      _
    // Predicated region
    $region22: #{tpu_custom_call.1} parent=1 // pred_check
      _
    $region23: #{tpu_custom_call.1} parent=1 // pred_check_branch
      %1220 = sbr.rel (0) target = $region25
    $region24: #{tpu_custom_call.1} parent=1 // pred_region
      %1221 = dma.done [#allocation4], 128
    $region25: #{tpu_custom_call.1} parent=1 // pred_fallthru
      _
    %1222 = vsyncpa [#allocation3], 1
    %1223 = vsyncpa [#allocation6], 1
    %1224 = vsyncpa [#allocation4], 1

</llo_original>
